<compile_context>
chip_gen: v7x
topology: tpu7x:2x2x1
jax: 0.10.0
libtpu: 0.0.40
codegen_flags: <defaults>
</compile_context>

<pallas_src>
import functools
import math

import jax
import jax.numpy as jnp
from jax.experimental import pallas as pl
from jax.experimental.pallas import tpu as pltpu

_LANE = 128


def _round_up(n, m):
    return ((n + m - 1) // m) * m


def _sublane_pack(dtype):
    # Dense sublane tile height: 8 rows for 4-byte, 16 for 2-byte, 32 for 1-byte.
    return 8 * max(1, 4 // jnp.dtype(dtype).itemsize)


def _device_budget():
    """Return (double-buffered block budget, vmem_limit_bytes) per TPU generation."""
    kind = ""
    try:
        kind = jax.devices()[0].device_kind.lower()
    except Exception:  # defensive fallback
        pass
    if "v5 lite" in kind or "v5e" in kind or "v5lite" in kind:
        # v5e: 16 MiB default scoped VMEM, 0.82 TB/s HBM -> modest blocks are
        # already <10% per-step overhead; raise the limit a little for safety.
        return 12 * 2**20, 24 * 2**20
    if "v7" in kind or "tpu7" in kind:
        # v7x: only 64 MiB physical VMEM per TC, but 3.2 TB/s HBM -> use
        # 4-8 MiB x blocks so the ~0.35 us/step overhead stays <10%.
        return 30 * 2**20, 44 * 2**20
    # v6e / v5p / default: 32 MiB default scoped VMEM, 128 MiB physical.
    return 22 * 2**20, 32 * 2**20


def _pe_add_kernel_bcast(x_ref, pe_ref, o_ref):
    # x_ref/o_ref: (bs, batch, d_model); pe_ref: (bs, d_model).
    o_ref[...] = x_ref[...] + pe_ref[...][:, None, :]


def _pe_add_kernel_flat(x_ref, pe_ref, o_ref, *, batch, d_model):
    # x_ref/o_ref: (bs, batch*d_model); pe_ref: (bs, d_model).
    pe = pe_ref[...]
    if batch == 1:
        o_ref[...] = x_ref[...] + pe
    else:
        for b in range(batch):  # static unroll; whole-vreg lane groups when d_model%128==0
            sl = slice(b * d_model, (b + 1) * d_model)
            o_ref[:, sl] = x_ref[:, sl] + pe


def build_positional_encoding(d_model, max_len=5000, dtype=jnp.float32):
    """Replicates the PyTorch buffer: pe of shape (max_len, 1, d_model)."""
    position = jnp.arange(max_len, dtype=jnp.float32)[:, None]
    div_term = jnp.exp(jnp.arange(0, d_model, 2, dtype=jnp.float32)
                       * (-math.log(10000.0) / d_model))
    pe = jnp.zeros((max_len, d_model), jnp.float32)
    pe = pe.at[:, 0::2].set(jnp.sin(position * div_term))
    pe = pe.at[:, 1::2].set(jnp.cos(position * div_term))
    return pe[:, None, :].astype(dtype)          # (max_len, 1, d_model)


@functools.partial(jax.jit, static_argnames=("block_seq",))
def positional_encoding(x, pe, *, block_seq=None):
    """x: (seq, batch, d_model); pe: (max_len, 1, d_model) or (max_len, d_model)."""
    seq, batch, d_model = x.shape
    pe2 = pe.reshape(pe.shape[0], d_model) if pe.ndim == 3 else pe
    max_len = pe2.shape[0]
    assert pe2.shape[1] == d_model
    assert seq <= max_len, "sequence longer than the positional-encoding table"

    itemsize = jnp.dtype(x.dtype).itemsize
    sub = _sublane_pack(x.dtype)
    use_flat = batch < sub          # small batch -> flatten to (seq, batch*d_model)

    # Padded per-seq-row VMEM bytes for an x/out block and a pe block.
    if use_flat:
        row_x = _round_up(batch * d_model, _LANE) * itemsize
    else:
        row_x = _round_up(batch, sub) * _round_up(d_model, _LANE) * itemsize
    row_pe = _round_up(d_model, _LANE) * itemsize

    budget, vmem_limit = _device_budget()
    if block_seq is None:
        # Full double-buffered footprint: 2 x (x block + out block + pe block).
        per_row = 2 * (2 * row_x + row_pe)
        bs = max(sub, (budget // per_row) // sub * sub)
        # Keep >= 2 grid steps when seq allows so the "parallel" seq axis can
        # shard across both v7x TensorCores (negligible cost on 1-TC chips).
        bs = min(bs, _round_up(pl.cdiv(seq, 2), sub))
        block_seq = seq if bs >= seq else bs
    else:
        block_seq = int(block_seq)
        if block_seq >= seq:
            block_seq = seq
        else:
            assert block_seq % 8 == 0, "block_seq must be a multiple of 8 (or >= seq)"

    # pe handling: pass the full table untouched when possible (only the rows a
    # block needs are DMA'd).  Slice/cast only pe[:seq] when the dtype differs,
    # or when a single non-multiple-of-8 block requires pe's row count to match.
    if pe2.dtype != x.dtype or (block_seq != max_len and block_seq % 8 != 0):
        pe2 = pe2[:seq].astype(x.dtype)

    grid = (pl.cdiv(seq, block_seq),)
    cost = pl.CostEstimate(
        flops=seq * batch * d_model,
        transcendentals=0,
        bytes_accessed=(2 * seq * batch * d_model + seq * d_model) * itemsize,
    )
    cparams = pltpu.CompilerParams(
        dimension_semantics=("parallel",),
        vmem_limit_bytes=vmem_limit,
    )

    if use_flat:
        x2 = x.reshape(seq, batch * d_model)    # free row-major view
        out = pl.pallas_call(
            functools.partial(_pe_add_kernel_flat, batch=batch, d_model=d_model),
            out_shape=jax.ShapeDtypeStruct((seq, batch * d_model), x.dtype),
            grid_spec=pltpu.PrefetchScalarGridSpec(
                num_scalar_prefetch=0,
                grid=grid,
                in_specs=[
                    pl.BlockSpec((block_seq, batch * d_model), lambda i: (i, 0)),
                    pl.BlockSpec((block_seq, d_model), lambda i: (i, 0)),
                ],
                out_specs=pl.BlockSpec((block_seq, batch * d_model), lambda i: (i, 0)),
            ),
            compiler_params=cparams,
            cost_estimate=cost,
            input_output_aliases={0: 0},
        )(x2, pe2)
        return out.reshape(seq, batch, d_model)

    return pl.pallas_call(
        _pe_add_kernel_bcast,
        out_shape=jax.ShapeDtypeStruct((seq, batch, d_model), x.dtype),
        grid_spec=pltpu.PrefetchScalarGridSpec(
            num_scalar_prefetch=0,
            grid=grid,
            in_specs=[
                pl.BlockSpec((block_seq, batch, d_model), lambda i: (i, 0, 0)),
                pl.BlockSpec((block_seq, d_model), lambda i: (i, 0)),
            ],
            out_specs=pl.BlockSpec((block_seq, batch, d_model), lambda i: (i, 0, 0)),
        ),
        compiler_params=cparams,
        cost_estimate=cost,
        input_output_aliases={0: 0},
    )(x, pe2)


def _reference(x, pe):
    pe3 = pe if pe.ndim == 3 else pe[:, None, :]
    return x + pe3[: x.shape[0]].astype(x.dtype)


if __name__ == "__main__":
    # 1) Small shapes matching the module layout (seq, batch, d_model); flat path.
    seq, batch, d_model = 8, 2, 32
    x = jax.random.normal(jax.random.PRNGKey(0), (seq, batch, d_model), jnp.float32)
    pe = build_positional_encoding(d_model, max_len=5000, dtype=jnp.float32)
    ref = _reference(x, pe)
    out = jax.block_until_ready(positional_encoding(x, pe))
    assert out.shape == x.shape and out.dtype == x.dtype
    assert jnp.allclose(out, ref, atol=1e-6, rtol=1e-6), "mismatch vs reference (small)"

    # 2) Lane-dense, multi-tile, small-batch (flattened path), explicit block_seq.
    seq2, batch2, d_model2 = 256, 4, 128
    x2 = jax.random.normal(jax.random.PRNGKey(1), (seq2, batch2, d_model2), jnp.float32)
    pe2 = build_positional_encoding(d_model2, max_len=512, dtype=jnp.float32)
    ref2 = _reference(x2, pe2)
    out2 = jax.block_until_ready(positional_encoding(x2, pe2, block_seq=64))
    assert jnp.allclose(out2, ref2, atol=1e-6, rtol=1e-6), "mismatch vs reference (tiled)"

    # 3) Larger batch (3-D broadcast path), auto block_seq (>= 2 grid steps).
    seq3, batch3, d_model3 = 64, 8, 128
    x3 = jax.random.normal(jax.random.PRNGKey(2), (seq3, batch3, d_model3), jnp.float32)
    pe3 = build_positional_encoding(d_model3, max_len=256, dtype=jnp.float32)
    ref3 = _reference(x3, pe3)
    out3 = jax.block_until_ready(positional_encoding(x3, pe3))
    assert jnp.allclose(out3, ref3, atol=1e-6, rtol=1e-6), "mismatch vs reference (3D)"

    # 4) bf16 end-to-end (table built in bf16, so no per-call cast of pe).
    seq4, batch4, d_model4 = 128, 2, 128
    x4 = jax.random.normal(jax.random.PRNGKey(3), (seq4, batch4, d_model4), jnp.bfloat16)
    pe4 = build_positional_encoding(d_model4, max_len=256, dtype=jnp.bfloat16)
    ref4 = _reference(x4, pe4)
    out4 = jax.block_until_ready(positional_encoding(x4, pe4))
    assert out4.dtype == jnp.bfloat16
    assert jnp.allclose(out4.astype(jnp.float32), ref4.astype(jnp.float32),
                        atol=1e-2, rtol=1e-2), "mismatch vs reference (bf16)"

    print("KERNEL_OK")
</pallas_src>

<mosaic_0001>
module attributes {stable_mosaic.version = 11 : i64} {
  func.func @_pe_add_kernel_flat(%arg0: i32, %arg1: memref<8x64xf32, #tpu.memory_space<vmem>>, %arg2: memref<8x32xf32, #tpu.memory_space<vmem>>, %arg3: memref<8x64xf32, #tpu.memory_space<vmem>>) attributes {dimension_semantics = [#tpu.dimension_semantics<parallel>], iteration_bounds = array<i64: 1>, scalar_prefetch = 0 : i64, scratch_operands = 0 : i64, tpu.core_type = #tpu.core_type<tc>, window_params = [{transform_indices = @transform_0, window_bounds = array<i64: 8, 64>}, {transform_indices = @transform_1, window_bounds = array<i64: 8, 32>}, {transform_indices = @transform_2, window_bounds = array<i64: 8, 64>}]} {
    %c0 = arith.constant 0 : index
    %c0_0 = arith.constant 0 : index
    %0 = vector.load %arg2[%c0, %c0_0] : memref<8x32xf32, #tpu.memory_space<vmem>>, vector<8x32xf32>
    %c0_1 = arith.constant 0 : index
    %c0_2 = arith.constant 0 : index
    %1 = vector.load %arg1[%c0_1, %c0_2] : memref<8x64xf32, #tpu.memory_space<vmem>>, vector<8x32xf32>
    %2 = arith.addf %1, %0 : vector<8x32xf32>
    %c0_3 = arith.constant 0 : index
    %c0_4 = arith.constant 0 : index
    %3 = vector.load %arg3[%c0_3, %c0_4] : memref<8x64xf32, #tpu.memory_space<vmem>>, vector<8x32xf32>
    tpu.vector_store %arg3[%c0_3, %c0_4], %2 {strides = array<i32>} : memref<8x64xf32, #tpu.memory_space<vmem>>, vector<8x32xf32>,
    %c0_5 = arith.constant 0 : index
    %c32 = arith.constant 32 : index
    %4 = vector.load %arg1[%c0_5, %c32] : memref<8x64xf32, #tpu.memory_space<vmem>>, vector<8x32xf32>
    %5 = arith.addf %4, %0 : vector<8x32xf32>
    %c0_6 = arith.constant 0 : index
    %c32_7 = arith.constant 32 : index
    %6 = vector.load %arg3[%c0_6, %c32_7] : memref<8x64xf32, #tpu.memory_space<vmem>>, vector<8x32xf32>
    tpu.vector_store %arg3[%c0_6, %c32_7], %5 {strides = array<i32>} : memref<8x64xf32, #tpu.memory_space<vmem>>, vector<8x32xf32>,
    return
  }
  func.func @transform_0(%arg0: i32) -> (i32, i32) {
    %c0_i32 = arith.constant 0 : i32
    %c0_i32_0 = arith.constant 0 : i32
    return %arg0, %c0_i32 : i32, i32
  }
  func.func @transform_1(%arg0: i32) -> (i32, i32) {
    %c0_i32 = arith.constant 0 : i32
    %c0_i32_0 = arith.constant 0 : i32
    return %arg0, %c0_i32 : i32, i32
  }
  func.func @transform_2(%arg0: i32) -> (i32, i32) {
    %c0_i32 = arith.constant 0 : i32
    %c0_i32_0 = arith.constant 0 : i32
    return %arg0, %c0_i32 : i32, i32
  }
}

</mosaic_0001>

<llo_original>
// kernel: positional_encoding.1
$region0: #{positional_encoding.1}
  #allocation0 [shape = 'u32[]', space=smem, size = 0x4, offset = 0x4, fixed_abs, tag = 'smem constant byte address 0x4 - core index']
  #allocation1 [shape = 'u32[144,128]{1,0:T(1,128)}', space=vmem, size = 0x12000, scoped, tag = 'internal scratch']
  %s0 = inlined_call_operand.vmem [shape: f32[8,64], index: 0, kind: input, shape index: {}, may-alias: {0,2}]
  %s1 = inlined_call_operand.vmem [shape: f32[5000,32], index: 1, kind: input, shape index: {}]
  %s2 = inlined_call_operand.vmem [shape: f32[8,64], index: 2, kind: output, shape index: {}, may-alias: {0,2}]
  %s3 = sld [smem:[#allocation0]]
  $region18: #{positional_encoding.1} parent=0
    _
  %s5 = ssub.s32 1, %s3
  %s6 = scalar_select 0, %s5, %s3
  // Predicated region
  $region2: #{positional_encoding.1} parent=0 // pred_check
    _
  $region3: #{positional_encoding.1} parent=0 // pred_check_branch
    %8 = sbr.rel (0) target = $region5
  $region4: #{positional_encoding.1} parent=0 // pred_region
    _
  $region5: #{positional_encoding.1} parent=0 // pred_fallthru
    _
  // Predicated region
  $region6: #{positional_encoding.1} parent=0 // pred_check
    _
  $region7: #{positional_encoding.1} parent=0 // pred_check_branch
    %10 = sbr.rel (0) target = $region9
  $region8: #{positional_encoding.1} parent=0 // pred_region
    _
  $region9: #{positional_encoding.1} parent=0 // pred_fallthru
    _
  %v11 = vld [vmem:[%s1] sm:$0xff]
  %v12 = vld [vmem:[%s0] sm:$0xff]
  %v13 = vadd.f32 %v12, %v11
  %vm14 = vcmask 261120
  %15 = vst.msk [vmem:[%s2] sm:$0xff] %vm14, %v13
  %v16 = vld [vmem:[%s0] sm:$0xff]
  %18 = vrot.lane.b32.xlu0 %v11, 32
  %v19 = vpop.permute.xlu0 %18
  %v21 = vadd.f32 %v16, %v19
  %vm22 = vcmask 523520
  %23 = vst.msk [vmem:[%s2] sm:$0xff] %vm22, %v21
  // Predicated region
  $region10: #{positional_encoding.1} parent=0 // pred_check
    _
  $region11: #{positional_encoding.1} parent=0 // pred_check_branch
    %25 = sbr.rel (0) target = $region13
  $region12: #{positional_encoding.1} parent=0 // pred_region
    _
  $region13: #{positional_encoding.1} parent=0 // pred_fallthru
    _
  // Predicated region
  $region14: #{positional_encoding.1} parent=0 // pred_check
    _
  $region15: #{positional_encoding.1} parent=0 // pred_check_branch
    %27 = sbr.rel (0) target = $region17
  $region16: #{positional_encoding.1} parent=0 // pred_region
    _
  $region17: #{positional_encoding.1} parent=0 // pred_fallthru
    _

</llo_original>
